<compile_context>
chip_gen: v7x
topology: tpu7x:2x2x1
jax: 0.10.0
libtpu: 0.0.40
codegen_flags: <defaults>
</compile_context>

<pallas_src>
import functools
import math

import jax
import jax.numpy as jnp
from jax.experimental import pallas as pl
from jax.experimental.pallas import tpu as pltpu


_LANE = 128

# Generation-aware VMEM budget (review item): ~75% of physical VMEM,
# capped at 96 MiB scoped.  v5e/v6e (128 MiB phys) -> 96 MiB, v7x (64 MiB) -> 48 MiB.
try:
    _VMEM_PHYS = int(pltpu.get_tpu_info().vmem_capacity_bytes)
except Exception:  # interpret mode / CPU tracing / older jax
    _VMEM_PHYS = 64 * 1024 * 1024
_VMEM_LIMIT = min(_VMEM_PHYS * 3 // 4, 96 * 1024 * 1024)

# Tile policy (review items): ~1-4 MiB tiles hit 85%+ of HBM roofline; the
# double-buffered in+out working set is 4x the tile, far under _VMEM_LIMIT.
_MAX_TILE_BYTES = min(4 << 20, _VMEM_LIMIT // 8)
_MIN_TILE_BYTES = min(1 << 20, _MAX_TILE_BYTES)
_TARGET_STEPS = 8   # >= 4 steps hides DMA prologue/epilogue; 8 splits evenly on 2 TCs


def _round_up(x, m):
    return ((x + m - 1) // m) * m


def _sublane_multiple(itemsize):
    # f32 -> 8, bf16 -> 16, int8/fp8 -> 32 (sub-32-bit dtypes pack along sublanes)
    return max(8, 32 // max(1, itemsize))


def _choose_tile(total, unit_bytes, align, target_steps=_TARGET_STEPS):
    """Pick a tile length along one axis (multiple of `align`, or == total).

    `unit_bytes` is the number of tile bytes contributed per unit of this axis.
    Priorities: never exceed ~_MAX_TILE_BYTES; try to give >= target_steps grid
    steps; but never shrink below ~_MIN_TILE_BYTES (per-step overhead wins).
    """
    unit_bytes = max(1, unit_bytes)
    cap = max(align, (_MAX_TILE_BYTES // unit_bytes) // align * align)
    floor_ = max(align, (_MIN_TILE_BYTES // unit_bytes) // align * align)
    floor_ = min(floor_, cap)
    step = _round_up(pl.cdiv(total, max(1, target_steps)), align)
    t = min(cap, max(floor_, step))
    if t >= total:
        t = total   # single full-extent block (always legal for BlockSpec)
    return t


# ---------------------------------------------------------------------------
# Kernels
# ---------------------------------------------------------------------------

def _ln_rows_kernel(x_ref, w_ref, b_ref, o_ref, *, eps: float):
    # x_ref: (tm, C) tile; normalize each row over C (lane axis).
    x = x_ref[...].astype(jnp.float32)
    u = jnp.mean(x, axis=-1, keepdims=True)
    xc = x - u
    s = jnp.mean(xc * xc, axis=-1, keepdims=True)          # biased variance
    inv = jax.lax.rsqrt(s + eps)
    y = xc * inv * w_ref[...].astype(jnp.float32) + b_ref[...].astype(jnp.float32)
    o_ref[...] = y.astype(o_ref.dtype)


def _ln_rows_packed_kernel(x_ref, w_ref, b_ref, o_ref, *, c: int, pack: int, eps: float):
    """Lane-dense packed rows: each 128-lane row holds `pack` logical rows of length c.

    Segmented mean/variance via MXU with 0/1 matrices built in-kernel from iota
    (no (L,L) HBM constant, no extra DMA).  Precision.HIGH (3-pass bf16) is used:
    the 0/1 operand is exact in bf16, leaving only ~2^-16 relative error from the
    bf16 split of x.  For L > 128 the reduction is factored into a (L,G) sum matmul
    plus a (G,L) broadcast matmul, which is cheaper in padded MXU tile-passes than
    the block-diagonal (L,L) form; for L == 128 the (L,L) form is cheapest.
    """
    L = c * pack
    x = x_ref[...].astype(jnp.float32)
    inv_c = jnp.float32(1.0 / c)

    if L == _LANE:
        rg = jax.lax.broadcasted_iota(jnp.int32, (L, L), 0) // c
        cg = jax.lax.broadcasted_iota(jnp.int32, (L, L), 1) // c
        seg = (rg == cg).astype(jnp.float32)                 # block-diagonal (L, L)

        def seg_mean(v):
            return jax.lax.dot(v, seg, precision=jax.lax.Precision.HIGH,
                               preferred_element_type=jnp.float32) * inv_c
    else:
        G = _round_up(pack, 8)                                # sublane-friendly group dim
        lr = jax.lax.broadcasted_iota(jnp.int32, (L, G), 0) // c
        lg = jax.lax.broadcasted_iota(jnp.int32, (L, G), 1)
        reduce_m = (lr == lg).astype(jnp.float32)             # (L, G) per-segment sum
        gr = jax.lax.broadcasted_iota(jnp.int32, (G, L), 0)
        gc = jax.lax.broadcasted_iota(jnp.int32, (G, L), 1) // c
        bcast_m = (gr == gc).astype(jnp.float32)              # (G, L) broadcast back

        def seg_mean(v):
            sums = jax.lax.dot(v, reduce_m, precision=jax.lax.Precision.HIGH,
                               preferred_element_type=jnp.float32)
            return jax.lax.dot(sums, bcast_m, precision=jax.lax.Precision.HIGH,
                               preferred_element_type=jnp.float32) * inv_c

    u = seg_mean(x)
    xc = x - u
    var = seg_mean(xc * xc)                                   # biased variance
    inv = jax.lax.rsqrt(var + eps)
    y = xc * inv * w_ref[...].astype(jnp.float32) + b_ref[...].astype(jnp.float32)
    o_ref[...] = y.astype(o_ref.dtype)


def _ln_cfirst_kernel(x_ref, w_ref, b_ref, o_ref, *, eps: float):
    # x_ref: (Bt, C, t_hw) tile; normalize over the C (sublane) axis, H*W on lanes.
    x = x_ref[...].astype(jnp.float32)
    u = jnp.mean(x, axis=1, keepdims=True)
    xc = x - u
    s = jnp.mean(xc * xc, axis=1, keepdims=True)              # biased variance
    inv = jax.lax.rsqrt(s + eps)
    y = xc * inv * w_ref[...].astype(jnp.float32) + b_ref[...].astype(jnp.float32)
    o_ref[...] = y.astype(o_ref.dtype)


# ---------------------------------------------------------------------------
# Wrappers
# ---------------------------------------------------------------------------

def _layernorm_rows(x2d, weight, bias, eps):
    """LayerNorm over the last dim of an (M, C) array (channels_last path)."""
    M, C = x2d.shape
    itemsize = x2d.dtype.itemsize
    sub = _sublane_multiple(itemsize)

    # Generalized lane packing: pack = 128 // gcd(C, 128) logical rows per
    # 128-lane row so L = lcm(C, 128) is a multiple of 128 (covers C = 32/96/192...).
    pack = _LANE // math.gcd(C, _LANE)
    L = pack * C
    use_packed = pack > 1 and (M % pack == 0) and L <= 1024

    params = pltpu.CompilerParams(
        dimension_semantics=("parallel",),
        vmem_limit_bytes=_VMEM_LIMIT,
    )

    if use_packed:
        Mp = M // pack
        xp = x2d.reshape(Mp, L)                        # free: contiguous reshape
        wp = jnp.tile(weight, pack).reshape(1, L)
        bp = jnp.tile(bias, pack).reshape(1, L)
        tm = _choose_tile(Mp, L * itemsize, sub)
        out = pl.pallas_call(
            functools.partial(_ln_rows_packed_kernel, c=C, pack=pack, eps=eps),
            out_shape=jax.ShapeDtypeStruct((Mp, L), x2d.dtype),
            grid_spec=pltpu.PrefetchScalarGridSpec(
                num_scalar_prefetch=0,
                grid=(pl.cdiv(Mp, tm),),
                in_specs=[
                    pl.BlockSpec((tm, L), lambda i: (i, 0)),
                    pl.BlockSpec((1, L), lambda i: (0, 0)),
                    pl.BlockSpec((1, L), lambda i: (0, 0)),
                ],
                out_specs=pl.BlockSpec((tm, L), lambda i: (i, 0)),
            ),
            compiler_params=params,
        )(xp, wp, bp)
        return out.reshape(M, C)

    tm = _choose_tile(M, C * itemsize, sub)
    out = pl.pallas_call(
        functools.partial(_ln_rows_kernel, eps=eps),
        out_shape=jax.ShapeDtypeStruct((M, C), x2d.dtype),
        grid_spec=pltpu.PrefetchScalarGridSpec(
            num_scalar_prefetch=0,
            grid=(pl.cdiv(M, tm),),
            in_specs=[
                pl.BlockSpec((tm, C), lambda i: (i, 0)),
                pl.BlockSpec((1, C), lambda i: (0, 0)),
                pl.BlockSpec((1, C), lambda i: (0, 0)),
            ],
            out_specs=pl.BlockSpec((tm, C), lambda i: (i, 0)),
        ),
        compiler_params=params,
    )(x2d, weight.reshape(1, C), bias.reshape(1, C))
    return out


def _layernorm_cfirst(x, weight, bias, eps):
    """LayerNorm over dim 1 of an NCHW tensor — no transposes, C on sublanes."""
    B, C, H, W = x.shape
    HW = H * W
    itemsize = x.dtype.itemsize
    x3 = x.reshape(B, C, HW)                 # free: contiguous reshape

    bytes_per_b = C * HW * itemsize
    if bytes_per_b >= _MIN_TILE_BYTES or B == 1:
        # Large spatial extent: one batch element per step, tile H*W on lanes.
        bt = 1
        t_hw = _choose_tile(HW, C * itemsize, _LANE,
                            target_steps=max(1, pl.cdiv(_TARGET_STEPS, B)))
    else:
        # Small H*W (late ConvNeXt stages): block several batch elements per step
        # so each tile reaches ~1-4 MiB and the 0.35 us/step overhead amortizes.
        bt = _choose_tile(B, bytes_per_b, 1)
        t_hw = HW

    out = pl.pallas_call(
        functools.partial(_ln_cfirst_kernel, eps=eps),
        out_shape=jax.ShapeDtypeStruct((B, C, HW), x.dtype),
        grid_spec=pltpu.PrefetchScalarGridSpec(
            num_scalar_prefetch=0,
            grid=(pl.cdiv(B, bt), pl.cdiv(HW, t_hw)),
            in_specs=[
                pl.BlockSpec((bt, C, t_hw), lambda b, j: (b, 0, j)),
                pl.BlockSpec((1, C, 1), lambda b, j: (0, 0, 0)),
                pl.BlockSpec((1, C, 1), lambda b, j: (0, 0, 0)),
            ],
            out_specs=pl.BlockSpec((bt, C, t_hw), lambda b, j: (b, 0, j)),
        ),
        compiler_params=pltpu.CompilerParams(
            dimension_semantics=("parallel", "parallel"),
            vmem_limit_bytes=_VMEM_LIMIT,
        ),
    )(x3, weight.reshape(1, C, 1), bias.reshape(1, C, 1))
    return out.reshape(B, C, H, W)


class MetaAILayerNormPallas:
    """JAX/Pallas port of ebtorch MetaAILayerNorm (forward pass)."""

    def __init__(self, normalized_shape: int, eps: float = 1e-6,
                 data_format: str = "channels_last"):
        if data_format not in ("channels_last", "channels_first"):
            raise NotImplementedError
        self.eps = float(eps)
        self.data_format = data_format
        self.normalized_shape = normalized_shape
        # Deterministic parameter init (matches nn.Parameter defaults).
        self.weight = jnp.ones((normalized_shape,), dtype=jnp.float32)
        self.bias = jnp.zeros((normalized_shape,), dtype=jnp.float32)

    def __call__(self, x):
        if self.data_format == "channels_last":
            C = x.shape[-1]
            assert C == self.normalized_shape
            lead = x.shape[:-1]
            y = _layernorm_rows(x.reshape(-1, C), self.weight, self.bias, self.eps)
            return y.reshape(*lead, C)
        else:
            # channels_first: x is NCHW (B, C, H, W) — normalize over dim 1.
            assert x.shape[1] == self.normalized_shape
            return _layernorm_cfirst(x, self.weight, self.bias, self.eps)


# ---------------------------------------------------------------------------
# References & self-test
# ---------------------------------------------------------------------------

def _ref_channels_first(x, w, b, eps):
    u = jnp.mean(x, axis=1, keepdims=True)
    s = jnp.mean((x - u) ** 2, axis=1, keepdims=True)
    xn = (x - u) / jnp.sqrt(s + eps)
    return w[:, None, None] * xn + b[:, None, None]


def _ref_channels_last(x, w, b, eps):
    u = jnp.mean(x, axis=-1, keepdims=True)
    s = jnp.mean((x - u) ** 2, axis=-1, keepdims=True)
    return (x - u) / jnp.sqrt(s + eps) * w + b


if __name__ == "__main__":
    key = jax.random.PRNGKey(0)
    k1, k2, k3, k4 = jax.random.split(key, 4)

    # 1) channels_first: NCHW input (stem-style activation, C on sublanes).
    B, C, H, W = 2, 32, 16, 16
    x_cf = jax.random.normal(k1, (B, C, H, W), dtype=jnp.float32)
    ln_cf = MetaAILayerNormPallas(C, eps=1e-6, data_format="channels_first")
    ln_cf.weight = jnp.linspace(0.5, 1.5, C, dtype=jnp.float32)
    ln_cf.bias = jnp.linspace(-0.2, 0.2, C, dtype=jnp.float32)
    y_cf = jax.block_until_ready(ln_cf(x_cf))
    y_cf_ref = _ref_channels_first(x_cf, ln_cf.weight, ln_cf.bias, ln_cf.eps)
    assert y_cf.shape == (B, C, H, W)
    assert jnp.allclose(y_cf, y_cf_ref, atol=1e-5, rtol=1e-5)

    # 2) channels_last C=32 (< 128): packed lane-dense path, L == 128 branch.
    #    (Precision.HIGH segmented stats -> ~2^-16 relative error; tolerance 2e-5.)
    x_cl = jax.random.normal(k2, (2, 8, 8, 32), dtype=jnp.float32)
    ln_cl = MetaAILayerNormPallas(32, eps=1e-6, data_format="channels_last")
    ln_cl.weight = jnp.linspace(1.5, 0.5, 32, dtype=jnp.float32)
    ln_cl.bias = jnp.linspace(0.1, -0.1, 32, dtype=jnp.float32)
    y_cl = jax.block_until_ready(ln_cl(x_cl))
    y_cl_ref = _ref_channels_last(x_cl, ln_cl.weight, ln_cl.bias, ln_cl.eps)
    assert y_cl.shape == (2, 8, 8, 32)
    assert jnp.allclose(y_cl, y_cl_ref, atol=2e-5, rtol=1e-5)

    # 3) channels_last C=96 (ConvNeXt width): generalized packing, factored
    #    reduce/broadcast matmul branch (L = 384).
    x_c96 = jax.random.normal(k3, (2, 4, 4, 96), dtype=jnp.float32)
    ln_c96 = MetaAILayerNormPallas(96, eps=1e-6, data_format="channels_last")
    ln_c96.weight = jnp.linspace(0.9, 1.1, 96, dtype=jnp.float32)
    ln_c96.bias = jnp.linspace(-0.1, 0.1, 96, dtype=jnp.float32)
    y_c96 = jax.block_until_ready(ln_c96(x_c96))
    y_c96_ref = _ref_channels_last(x_c96, ln_c96.weight, ln_c96.bias, ln_c96.eps)
    assert y_c96.shape == (2, 4, 4, 96)
    assert jnp.allclose(y_c96, y_c96_ref, atol=2e-5, rtol=1e-5)

    # 4) channels_last C=256 (multiple of 128): plain lane-reduction path.
    x_w = jax.random.normal(k4, (2, 4, 4, 256), dtype=jnp.float32)
    ln_w = MetaAILayerNormPallas(256, eps=1e-6, data_format="channels_last")
    ln_w.weight = jnp.linspace(0.8, 1.2, 256, dtype=jnp.float32)
    ln_w.bias = jnp.linspace(-0.05, 0.05, 256, dtype=jnp.float32)
    y_w = jax.block_until_ready(ln_w(x_w))
    y_w_ref = _ref_channels_last(x_w, ln_w.weight, ln_w.bias, ln_w.eps)
    assert y_w.shape == (2, 4, 4, 256)
    assert jnp.allclose(y_w, y_w_ref, atol=1e-5, rtol=1e-5)

    print("KERNEL_OK")
</pallas_src>

<mosaic_0001>
module attributes {stable_mosaic.version = 11 : i64} {
  func.func @_ln_cfirst_kernel(%arg0: i32, %arg1: i32, %arg2: memref<2x32x256xf32, #tpu.memory_space<vmem>>, %arg3: memref<1x32x1xf32, #tpu.memory_space<vmem>>, %arg4: memref<1x32x1xf32, #tpu.memory_space<vmem>>, %arg5: memref<2x32x256xf32, #tpu.memory_space<vmem>>) attributes {dimension_semantics = [#tpu.dimension_semantics<parallel>, #tpu.dimension_semantics<parallel>], iteration_bounds = array<i64: 1, 1>, scalar_prefetch = 0 : i64, scratch_operands = 0 : i64, tpu.core_type = #tpu.core_type<tc>, window_params = [{transform_indices = @transform_0, window_bounds = array<i64: 2, 32, 256>}, {pipeline_mode = #tpu.pipeline_mode<synchronous>, transform_indices = @transform_1, window_bounds = array<i64: 1, 32, 1>}, {pipeline_mode = #tpu.pipeline_mode<synchronous>, transform_indices = @transform_2, window_bounds = array<i64: 1, 32, 1>}, {transform_indices = @transform_3, window_bounds = array<i64: 2, 32, 256>}]} {
    %c0 = arith.constant 0 : index
    %c0_0 = arith.constant 0 : index
    %c0_1 = arith.constant 0 : index
    %0 = vector.load %arg2[%c0, %c0_0, %c0_1] : memref<2x32x256xf32, #tpu.memory_space<vmem>>, vector<2x32x256xf32>
    %cst = arith.constant dense<0.000000e+00> : vector<2x256xf32>
    %1 = vector.multi_reduction <add>, %0, %cst [1] : vector<2x32x256xf32> to vector<2x256xf32>
    %2 = vector.shape_cast %1 : vector<2x256xf32> to vector<2x1x256xf32>
    %cst_2 = arith.constant 3.200000e+01 : f32
    %3 = vector.broadcast %cst_2 : f32 to vector<2x1x256xf32>
    %4 = arith.divf %2, %3 : vector<2x1x256xf32>
    %5 = vector.broadcast %4 : vector<2x1x256xf32> to vector<2x32x256xf32>
    %6 = arith.subf %0, %5 : vector<2x32x256xf32>
    %7 = arith.mulf %6, %6 : vector<2x32x256xf32>
    %cst_3 = arith.constant dense<0.000000e+00> : vector<2x256xf32>
    %8 = vector.multi_reduction <add>, %7, %cst_3 [1] : vector<2x32x256xf32> to vector<2x256xf32>
    %9 = vector.shape_cast %8 : vector<2x256xf32> to vector<2x1x256xf32>
    %cst_4 = arith.constant 3.200000e+01 : f32
    %10 = vector.broadcast %cst_4 : f32 to vector<2x1x256xf32>
    %11 = arith.divf %9, %10 : vector<2x1x256xf32>
    %cst_5 = arith.constant 9.99999997E-7 : f32
    %12 = vector.broadcast %cst_5 : f32 to vector<2x1x256xf32>
    %13 = arith.addf %11, %12 : vector<2x1x256xf32>
    %14 = math.rsqrt %13 : vector<2x1x256xf32>
    %15 = vector.broadcast %14 : vector<2x1x256xf32> to vector<2x32x256xf32>
    %16 = arith.mulf %6, %15 : vector<2x32x256xf32>
    %c0_6 = arith.constant 0 : index
    %c0_7 = arith.constant 0 : index
    %c0_8 = arith.constant 0 : index
    %17 = vector.load %arg3[%c0_6, %c0_7, %c0_8] : memref<1x32x1xf32, #tpu.memory_space<vmem>>, vector<1x32x1xf32>
    %18 = vector.broadcast %17 : vector<1x32x1xf32> to vector<2x32x256xf32>
    %19 = arith.mulf %16, %18 : vector<2x32x256xf32>
    %c0_9 = arith.constant 0 : index
    %c0_10 = arith.constant 0 : index
    %c0_11 = arith.constant 0 : index
    %20 = vector.load %arg4[%c0_9, %c0_10, %c0_11] : memref<1x32x1xf32, #tpu.memory_space<vmem>>, vector<1x32x1xf32>
    %21 = vector.broadcast %20 : vector<1x32x1xf32> to vector<2x32x256xf32>
    %22 = arith.addf %19, %21 : vector<2x32x256xf32>
    %c0_12 = arith.constant 0 : index
    %c0_13 = arith.constant 0 : index
    %c0_14 = arith.constant 0 : index
    %23 = vector.load %arg5[%c0_12, %c0_13, %c0_14] : memref<2x32x256xf32, #tpu.memory_space<vmem>>, vector<2x32x256xf32>
    tpu.vector_store %arg5[%c0_12, %c0_13, %c0_14], %22 {strides = array<i32>} : memref<2x32x256xf32, #tpu.memory_space<vmem>>, vector<2x32x256xf32>,
    return
  }
  func.func @transform_0(%arg0: i32, %arg1: i32) -> (i32, i32, i32) {
    %c0_i32 = arith.constant 0 : i32
    %c0_i32_0 = arith.constant 0 : i32
    return %arg0, %c0_i32, %arg1 : i32, i32, i32
  }
  func.func @transform_1(%arg0: i32, %arg1: i32) -> (i32, i32, i32) {
    %c0_i32 = arith.constant 0 : i32
    %c0_i32_0 = arith.constant 0 : i32
    %c0_i32_1 = arith.constant 0 : i32
    %c0_i32_2 = arith.constant 0 : i32
    return %c0_i32, %c0_i32_0, %c0_i32_1 : i32, i32, i32
  }
  func.func @transform_2(%arg0: i32, %arg1: i32) -> (i32, i32, i32) {
    %c0_i32 = arith.constant 0 : i32
    %c0_i32_0 = arith.constant 0 : i32
    %c0_i32_1 = arith.constant 0 : i32
    %c0_i32_2 = arith.constant 0 : i32
    return %c0_i32, %c0_i32_0, %c0_i32_1 : i32, i32, i32
  }
  func.func @transform_3(%arg0: i32, %arg1: i32) -> (i32, i32, i32) {
    %c0_i32 = arith.constant 0 : i32
    %c0_i32_0 = arith.constant 0 : i32
    return %arg0, %c0_i32, %arg1 : i32, i32, i32
  }
}

</mosaic_0001>

<llo_original>
// kernel: tpu_custom_call.1
$region0: #{tpu_custom_call.1}
  #allocation0 [shape = 'u32[]', space=smem, size = 0x4, offset = 0x4, fixed_abs, tag = 'smem constant byte address 0x4 - core index']
  #allocation1 [shape = 'u32[144,128]{1,0:T(1,128)}', space=vmem, size = 0x12000, scoped, tag = 'internal scratch']
  %s0 = inlined_call_operand.hbm [shape: f32[2,32,256], index: 0, kind: input, shape index: {}]
  %s1 = inlined_call_operand.vmem [shape: f32[1,32,1], index: 1, kind: input, shape index: {}]
  %s2 = inlined_call_operand.vmem [shape: f32[1,32,1], index: 2, kind: input, shape index: {}]
  %s3 = inlined_call_operand.hbm [shape: f32[2,32,256], index: 3, kind: output, shape index: {}]
  %s4 = sld [smem:[#allocation0]]
  $region26: #{tpu_custom_call.1} parent=0
    _
  %s6 = ssub.s32 1, %s4
  %s7 = scalar_select 0, %s6, %s4
  $region1: #{tpu_custom_call.1} parent=0
    #allocation2 [shape = 'u8[65536]{0}', space=vmem, size = 0x10000, scoped, tag = 'input window, operand 0, single buffered']
    #allocation3 [shape = 's32[1]{0}', space=sflag, size = 0x4, scoped, tag = 'scoped memory for tpu_custom_call.1']
    #allocation4 [shape = 's32[1]{0}', space=sflag, size = 0x4, scoped, tag = 'scoped memory for tpu_custom_call.1']
    #allocation5 [shape = 'u8[65536]{0}', space=vmem, size = 0x10000, scoped, tag = 'output window, operand 0, single buffered']
    %8 = vsyncpa [#allocation3], 0
    %9 = vsyncpa [#allocation4], 0
    // Predicated region
    $region2: #{tpu_custom_call.1} parent=1 // pred_check
      _
    $region3: #{tpu_custom_call.1} parent=1 // pred_check_branch
      %11 = sbr.rel (0) target = $region5
    $region4: #{tpu_custom_call.1} parent=1 // pred_region
      %s13 = ssub.s32 2048, 2048
      %14 = vsyncadd [#allocation3], %s13
      %s15 = sshll.u32 [#allocation2], 4
      %s16 = int_to_ptr.vmem [resolvable:$true] %s15
      %21 = dma.hbm_to_vmem [thread:$0]  %s0, 2048, %s16, [#allocation3], 256, 256, 16
    $region5: #{tpu_custom_call.1} parent=1 // pred_fallthru
      _
    // Predicated region
    $region6: #{tpu_custom_call.1} parent=1 // pred_check
      _
    $region7: #{tpu_custom_call.1} parent=1 // pred_check_branch
      %23 = sbr.rel (0) target = $region9
    $region8: #{tpu_custom_call.1} parent=1 // pred_region
      _
    $region9: #{tpu_custom_call.1} parent=1 // pred_fallthru
      _
    // Predicated region
    $region10: #{tpu_custom_call.1} parent=1 // pred_check
      _
    $region11: #{tpu_custom_call.1} parent=1 // pred_check_branch
      %25 = sbr.rel (0) target = $region13
    $region12: #{tpu_custom_call.1} parent=1 // pred_region
      _
    $region13: #{tpu_custom_call.1} parent=1 // pred_fallthru
      _
    // Predicated region
    $region14: #{tpu_custom_call.1} parent=1 // pred_check
      _
    $region15: #{tpu_custom_call.1} parent=1 // pred_check_branch
      %27 = sbr.rel (0) target = $region17
    $region16: #{tpu_custom_call.1} parent=1 // pred_region
      %28 = dma.done [#allocation3], 2048
    $region17: #{tpu_custom_call.1} parent=1 // pred_fallthru
      _
    %v29 = vld [vmem:[#allocation2] sm:$0xff]
    %v30 = vld [vmem:[#allocation2 + $0x8] sm:$0xff]
    %v31 = vld [vmem:[#allocation2 + $0x10] sm:$0xff]
    %v32 = vld [vmem:[#allocation2 + $0x18] sm:$0xff]
    %v33 = vld [vmem:[#allocation2 + $0x20] sm:$0xff]
    %v34 = vld [vmem:[#allocation2 + $0x28] sm:$0xff]
    %v35 = vld [vmem:[#allocation2 + $0x30] sm:$0xff]
    %v36 = vld [vmem:[#allocation2 + $0x38] sm:$0xff]
    %v37 = vld [vmem:[#allocation2 + $0x40] sm:$0xff]
    %v38 = vld [vmem:[#allocation2 + $0x48] sm:$0xff]
    %v39 = vld [vmem:[#allocation2 + $0x50] sm:$0xff]
    %v40 = vld [vmem:[#allocation2 + $0x58] sm:$0xff]
    %v41 = vld [vmem:[#allocation2 + $0x60] sm:$0xff]
    %v42 = vld [vmem:[#allocation2 + $0x68] sm:$0xff]
    %v43 = vld [vmem:[#allocation2 + $0x70] sm:$0xff]
    %v44 = vld [vmem:[#allocation2 + $0x78] sm:$0xff]
    %v45 = vadd.f32 %v29, %v31
    %v46 = vadd.f32 %v45, %v33
    %v47 = vadd.f32 %v46, %v35
    %v48 = vrot.slane %v47, 4
    %v49 = vadd.f32 %v47, %v48
    %v50 = vrot.slane %v49, 2
    %v51 = vadd.f32 %v49, %v50
    %v52 = vrot.slane %v51, 1
    %v53 = vadd.f32 %v51, %v52
    %v54 = vadd.f32 %v30, %v32
    %v55 = vadd.f32 %v54, %v34
    %v56 = vadd.f32 %v55, %v36
    %v57 = vrot.slane %v56, 4
    %v58 = vadd.f32 %v56, %v57
    %v59 = vrot.slane %v58, 2
    %v60 = vadd.f32 %v58, %v59
    %v61 = vrot.slane %v60, 1
    %v62 = vadd.f32 %v60, %v61
    %v63 = vadd.f32 %v37, %v39
    %v64 = vadd.f32 %v63, %v41
    %v65 = vadd.f32 %v64, %v43
    %v66 = vrot.slane %v65, 4
    %v67 = vadd.f32 %v65, %v66
    %v68 = vrot.slane %v67, 2
    %v69 = vadd.f32 %v67, %v68
    %v70 = vrot.slane %v69, 1
    %v71 = vadd.f32 %v69, %v70
    %v72 = vadd.f32 %v38, %v40
    %v73 = vadd.f32 %v72, %v42
    %v74 = vadd.f32 %v73, %v44
    %v75 = vrot.slane %v74, 4
    %v76 = vadd.f32 %v74, %v75
    %v77 = vrot.slane %v76, 2
    %v78 = vadd.f32 %v76, %v77
    %v79 = vrot.slane %v78, 1
    %v80 = vadd.f32 %v78, %v79
    %v81 = vrcp.pop 32.0
    %v82 = vmul.f32 %v53, %v81
    %v83 = vmul.f32 %v62, %v81
    %v84 = vmul.f32 %v71, %v81
    %v85 = vmul.f32 %v80, %v81
    %v86 = vsub.f32 %v29, %v82
    %v87 = vsub.f32 %v30, %v83
    %v88 = vsub.f32 %v31, %v82
    %v89 = vsub.f32 %v32, %v83
    %v90 = vsub.f32 %v33, %v82
    %v91 = vsub.f32 %v34, %v83
    %v92 = vsub.f32 %v35, %v82
    %v93 = vsub.f32 %v36, %v83
    %v94 = vsub.f32 %v37, %v84
    %v95 = vsub.f32 %v38, %v85
    %v96 = vsub.f32 %v39, %v84
    %v97 = vsub.f32 %v40, %v85
    %v98 = vsub.f32 %v41, %v84
    %v99 = vsub.f32 %v42, %v85
    %v100 = vsub.f32 %v43, %v84
    %v101 = vsub.f32 %v44, %v85
    %v102 = vmul.f32 %v86, %v86
    %v103 = vmul.f32 %v87, %v87
    %v104 = vmul.f32 %v88, %v88
    %v105 = vmul.f32 %v89, %v89
    %v106 = vmul.f32 %v90, %v90
    %v107 = vmul.f32 %v91, %v91
    %v108 = vmul.f32 %v92, %v92
    %v109 = vmul.f32 %v93, %v93
    %v110 = vmul.f32 %v94, %v94
    %v111 = vmul.f32 %v95, %v95
    %v112 = vmul.f32 %v96, %v96
    %v113 = vmul.f32 %v97, %v97
    %v114 = vmul.f32 %v98, %v98
    %v115 = vmul.f32 %v99, %v99
    %v116 = vmul.f32 %v100, %v100
    %v117 = vmul.f32 %v101, %v101
    %v118 = vadd.f32 %v102, %v104
    %v119 = vadd.f32 %v118, %v106
    %v120 = vadd.f32 %v119, %v108
    %v121 = vrot.slane %v120, 4
    %v122 = vadd.f32 %v120, %v121
    %v123 = vrot.slane %v122, 2
    %v124 = vadd.f32 %v122, %v123
    %v125 = vrot.slane %v124, 1
    %v126 = vadd.f32 %v124, %v125
    %v127 = vadd.f32 %v103, %v105
    %v128 = vadd.f32 %v127, %v107
    %v129 = vadd.f32 %v128, %v109
    %v130 = vrot.slane %v129, 4
    %v131 = vadd.f32 %v129, %v130
    %v132 = vrot.slane %v131, 2
    %v133 = vadd.f32 %v131, %v132
    %v134 = vrot.slane %v133, 1
    %v135 = vadd.f32 %v133, %v134
    %v136 = vadd.f32 %v110, %v112
    %v137 = vadd.f32 %v136, %v114
    %v138 = vadd.f32 %v137, %v116
    %v139 = vrot.slane %v138, 4
    %v140 = vadd.f32 %v138, %v139
    %v141 = vrot.slane %v140, 2
    %v142 = vadd.f32 %v140, %v141
    %v143 = vrot.slane %v142, 1
    %v144 = vadd.f32 %v142, %v143
    %v145 = vadd.f32 %v111, %v113
    %v146 = vadd.f32 %v145, %v115
    %v147 = vadd.f32 %v146, %v117
    %v148 = vrot.slane %v147, 4
    %v149 = vadd.f32 %v147, %v148
    %v150 = vrot.slane %v149, 2
    %v151 = vadd.f32 %v149, %v150
    %v152 = vrot.slane %v151, 1
    %v153 = vadd.f32 %v151, %v152
    %v154 = vmul.f32 %v126, %v81
    %v155 = vmul.f32 %v135, %v81
    %v156 = vmul.f32 %v144, %v81
    %v157 = vmul.f32 %v153, %v81
    %v158 = vadd.f32 %v154, 1e-06
    %v159 = vadd.f32 %v155, 1e-06
    %v160 = vadd.f32 %v156, 1e-06
    %v161 = vadd.f32 %v157, 1e-06
    %v162 = vrsqrt.pop %v158
    %v163 = vrsqrt.pop %v159
    %v164 = vrsqrt.pop %v160
    %v165 = vrsqrt.pop %v161
    %v166 = vmul.f32 %v86, %v162
    %v167 = vmul.f32 %v87, %v163
    %v168 = vmul.f32 %v88, %v162
    %v169 = vmul.f32 %v89, %v163
    %v170 = vmul.f32 %v90, %v162
    %v171 = vmul.f32 %v91, %v163
    %v172 = vmul.f32 %v92, %v162
    %v173 = vmul.f32 %v93, %v163
    %v174 = vmul.f32 %v94, %v164
    %v175 = vmul.f32 %v95, %v165
    %v176 = vmul.f32 %v96, %v164
    %v177 = vmul.f32 %v97, %v165
    %v178 = vmul.f32 %v98, %v164
    %v179 = vmul.f32 %v99, %v165
    %v180 = vmul.f32 %v100, %v164
    %v181 = vmul.f32 %v101, %v165
    %v182 = vld [vmem:[%s1] sm:$0xff]
    %v183 = vld [vmem:[%s1 + $0x8] sm:$0xff]
    %v184 = vld [vmem:[%s1 + $0x10] sm:$0xff]
    %v185 = vld [vmem:[%s1 + $0x18] sm:$0xff]
    %187 = vset.pattern.permute.xlu0 0
    %188 = vperm.xlu0 %187, %v182
    %v189 = vpop.permute.xlu0 %188
    %192 = vset.pattern.permute.xlu0 0
    %193 = vperm.xlu0 %192, %v183
    %v194 = vpop.permute.xlu0 %193
    %197 = vset.pattern.permute.xlu0 0
    %198 = vperm.xlu0 %197, %v184
    %v199 = vpop.permute.xlu0 %198
    %202 = vset.pattern.permute.xlu0 0
    %203 = vperm.xlu0 %202, %v185
    %v204 = vpop.permute.xlu0 %203
    %v206 = vmul.f32 %v166, %v189
    %v207 = vmul.f32 %v167, %v189
    %v208 = vmul.f32 %v168, %v194
    %v209 = vmul.f32 %v169, %v194
    %v210 = vmul.f32 %v170, %v199
    %v211 = vmul.f32 %v171, %v199
    %v212 = vmul.f32 %v172, %v204
    %v213 = vmul.f32 %v173, %v204
    %v214 = vmul.f32 %v174, %v189
    %v215 = vmul.f32 %v175, %v189
    %v216 = vmul.f32 %v176, %v194
    %v217 = vmul.f32 %v177, %v194
    %v218 = vmul.f32 %v178, %v199
    %v219 = vmul.f32 %v179, %v199
    %v220 = vmul.f32 %v180, %v204
    %v221 = vmul.f32 %v181, %v204
    %v222 = vld [vmem:[%s2] sm:$0xff]
    %v223 = vld [vmem:[%s2 + $0x8] sm:$0xff]
    %v224 = vld [vmem:[%s2 + $0x10] sm:$0xff]
    %v225 = vld [vmem:[%s2 + $0x18] sm:$0xff]
    %227 = vset.pattern.permute.xlu0 0
    %228 = vperm.xlu0 %227, %v222
    %v229 = vpop.permute.xlu0 %228
    %232 = vset.pattern.permute.xlu0 0
    %233 = vperm.xlu0 %232, %v223
    %v234 = vpop.permute.xlu0 %233
    %237 = vset.pattern.permute.xlu0 0
    %238 = vperm.xlu0 %237, %v224
    %v239 = vpop.permute.xlu0 %238
    %242 = vset.pattern.permute.xlu0 0
    %243 = vperm.xlu0 %242, %v225
    %v244 = vpop.permute.xlu0 %243
    %v246 = vadd.f32 %v206, %v229
    %v247 = vadd.f32 %v207, %v229
    %v248 = vadd.f32 %v208, %v234
    %v249 = vadd.f32 %v209, %v234
    %v250 = vadd.f32 %v210, %v239
    %v251 = vadd.f32 %v211, %v239
    %v252 = vadd.f32 %v212, %v244
    %v253 = vadd.f32 %v213, %v244
    %v254 = vadd.f32 %v214, %v229
    %v255 = vadd.f32 %v215, %v229
    %v256 = vadd.f32 %v216, %v234
    %v257 = vadd.f32 %v217, %v234
    %v258 = vadd.f32 %v218, %v239
    %v259 = vadd.f32 %v219, %v239
    %v260 = vadd.f32 %v220, %v244
    %v261 = vadd.f32 %v221, %v244
    %262 = vst [vmem:[#allocation5] sm:$0xff] %v246
    %263 = vst [vmem:[#allocation5 + $0x8] sm:$0xff] %v247
    %264 = vst [vmem:[#allocation5 + $0x10] sm:$0xff] %v248
    %265 = vst [vmem:[#allocation5 + $0x18] sm:$0xff] %v249
    %266 = vst [vmem:[#allocation5 + $0x20] sm:$0xff] %v250
    %267 = vst [vmem:[#allocation5 + $0x28] sm:$0xff] %v251
    %268 = vst [vmem:[#allocation5 + $0x30] sm:$0xff] %v252
    %269 = vst [vmem:[#allocation5 + $0x38] sm:$0xff] %v253
    %270 = vst [vmem:[#allocation5 + $0x40] sm:$0xff] %v254
    %271 = vst [vmem:[#allocation5 + $0x48] sm:$0xff] %v255
    %272 = vst [vmem:[#allocation5 + $0x50] sm:$0xff] %v256
    %273 = vst [vmem:[#allocation5 + $0x58] sm:$0xff] %v257
    %274 = vst [vmem:[#allocation5 + $0x60] sm:$0xff] %v258
    %275 = vst [vmem:[#allocation5 + $0x68] sm:$0xff] %v259
    %276 = vst [vmem:[#allocation5 + $0x70] sm:$0xff] %v260
    %277 = vst [vmem:[#allocation5 + $0x78] sm:$0xff] %v261
    // Predicated region
    $region18: #{tpu_custom_call.1} parent=1 // pred_check
      _
    $region19: #{tpu_custom_call.1} parent=1 // pred_check_branch
      %279 = sbr.rel (0) target = $region21
    $region20: #{tpu_custom_call.1} parent=1 // pred_region
      %s281 = ssub.s32 2048, 2048
      %282 = vsyncadd [#allocation4], %s281
      %s283 = sshll.u32 [#allocation5], 4
      %s284 = int_to_ptr.vmem [resolvable:$true] %s283
      %289 = dma.vmem_to_hbm [thread:$0]  %s284, 2048, %s3, [#allocation4], 256, 256, 16
    $region21: #{tpu_custom_call.1} parent=1 // pred_fallthru
      _
    // Predicated region
    $region22: #{tpu_custom_call.1} parent=1 // pred_check
      _
    $region23: #{tpu_custom_call.1} parent=1 // pred_check_branch
      %291 = sbr.rel (0) target = $region25
    $region24: #{tpu_custom_call.1} parent=1 // pred_region
      %292 = dma.done [#allocation4], 2048
    $region25: #{tpu_custom_call.1} parent=1 // pred_fallthru
      _
    %293 = vsyncpa [#allocation3], 1
    %294 = vsyncpa [#allocation4], 1

</llo_original>
